<compile_context>
chip_gen: v5e
topology: v5e:2x2
jax: 0.10.0
libtpu: 0.0.40
codegen_flags: <defaults>
</compile_context>

<pallas_src>
import jax
import jax.numpy as jnp
from jax.experimental import pallas as pl
from jax.experimental.pallas import tpu as pltpu

# ---------------- problem sizes (small, synthetic) ----------------
N = 32       # number of nodes
D_IN = 16    # input feature dim
H = 4        # num heads
F = 8        # out_feats per head
NEG_SLOPE = 0.2


def _gat_fused_kernel(feat_ref, feat_t_ref, w_ref, wa_l_t_ref, wa_r_ref,
                      adjb_ref, bias_ref, out_ref):
    """Single invocation: all heads fused, lane-dense (N, H*F) output."""
    feat = feat_ref[...]                                                    # (N, D_in)

    # Projection for all heads in one MXU matmul: (N, D_in) @ (D_in, H*F)
    fsrc = jnp.dot(feat, w_ref[...], preferred_element_type=jnp.float32)    # (N, H*F)

    # Attention scores.  el_t comes out directly in (H, N) row layout (per-source
    # score broadcast along the lane/src axis), er in (N, H) column layout
    # (per-destination score broadcast along the sublane/dst axis) -> no transpose.
    el_t = jnp.dot(wa_l_t_ref[...], feat_t_ref[...],
                   preferred_element_type=jnp.float32)                      # (H, N)
    er = jnp.dot(feat, wa_r_ref[...], preferred_element_type=jnp.float32)   # (N, H)

    adjb = adjb_ref[...]                                                    # (N, N): 0 on edges, -1e30 off

    outs = []
    for h in range(H):                                                      # short unrolled head loop
        e = er[:, h:h + 1] + el_t[h:h + 1, :]                               # (N, N) rows = dst, cols = src
        e = jnp.where(e >= 0, e, NEG_SLOPE * e)                             # leaky relu
        e = e + adjb                                                        # mask non-edges

        # edge softmax over incoming edges (per destination row)
        m = jnp.max(e, axis=-1, keepdims=True)
        p = jnp.exp(e - m)
        denom = jnp.sum(p, axis=-1, keepdims=True)
        a = p * pl.reciprocal(denom, approx=False)                          # (N, N)

        # message aggregation on MXU: rst[v] = sum_u a[v, u] * fsrc[u, head h]
        outs.append(jnp.dot(a, fsrc[:, h * F:(h + 1) * F],
                            preferred_element_type=jnp.float32))            # (N, F)

    # single lane-dense store of all heads + bias
    out_ref[...] = jnp.concatenate(outs, axis=-1) + bias_ref[...]           # (N, H*F)


def gat_forward(feat, w_hdf, attn_l, attn_r, adj, bias_hf):
    """feat (N, D_in), w_hdf (H, D_in, F), attn_* (H, 1, F), adj (N, N) [dst, src],
    bias (H, 1, F) -> (N, H, F)."""
    # Fuse per-head projection weights into a single (D_in, H*F) matrix.
    w_all = jnp.transpose(w_hdf, (1, 0, 2)).reshape(D_IN, H * F).astype(jnp.float32)

    # Fold the attention vectors into the projection:
    #   el[u, h] = sum_d feat[u, d] * (sum_f W[h, d, f] * attn_l[h, f])
    wa_l_t = jnp.einsum('hdf,hf->hd', w_hdf, attn_l.reshape(H, F)).astype(jnp.float32)  # (H, D_in)
    wa_r = jnp.einsum('hdf,hf->dh', w_hdf, attn_r.reshape(H, F)).astype(jnp.float32)    # (D_in, H)

    # Adjacency as an additive bias matrix: 0 on edges, -1e30 on non-edges.
    adj_bias = jnp.where(adj > 0, 0.0, -1e30).astype(jnp.float32)            # (N, N)
    bias_row = bias_hf.reshape(1, H * F).astype(jnp.float32)                 # (1, H*F)

    feat = feat.astype(jnp.float32)
    feat_t = feat.T                                                          # (D_in, N) for el layout

    out_flat = pl.pallas_call(
        _gat_fused_kernel,
        out_shape=jax.ShapeDtypeStruct((N, H * F), jnp.float32),
        in_specs=[
            pl.BlockSpec(memory_space=pltpu.MemorySpace.VMEM),   # feat
            pl.BlockSpec(memory_space=pltpu.MemorySpace.VMEM),   # feat^T
            pl.BlockSpec(memory_space=pltpu.MemorySpace.VMEM),   # fused projection weights
            pl.BlockSpec(memory_space=pltpu.MemorySpace.VMEM),   # fused attn_l projection (H, D_in)
            pl.BlockSpec(memory_space=pltpu.MemorySpace.VMEM),   # fused attn_r projection (D_in, H)
            pl.BlockSpec(memory_space=pltpu.MemorySpace.VMEM),   # adjacency additive mask
            pl.BlockSpec(memory_space=pltpu.MemorySpace.VMEM),   # bias row
        ],
        out_specs=pl.BlockSpec(memory_space=pltpu.MemorySpace.VMEM),
    )(feat, feat_t, w_all, wa_l_t, wa_r, adj_bias, bias_row)

    return out_flat.reshape(N, H, F)                                         # free reshape (no transpose)


def gat_reference(feat, w_hdf, attn_l, attn_r, adj, bias_hf):
    """Pure-JAX reference with the module's original semantics."""
    w_dhf = jnp.transpose(w_hdf, (1, 0, 2)).reshape(D_IN, H * F)
    fsrc = (feat @ w_dhf).reshape(N, H, F)
    al = attn_l.reshape(1, H, F)
    ar = attn_r.reshape(1, H, F)
    el = jnp.sum(fsrc * al, axis=-1)                          # (N, H)
    er = jnp.sum(fsrc * ar, axis=-1)                          # (N, H)
    e = er[:, None, :] + el[None, :, :]                       # (dst, src, H)
    e = jnp.where(e >= 0, e, NEG_SLOPE * e)
    mask = (adj > 0)[:, :, None]
    e = jnp.where(mask, e, -jnp.inf)
    a = jax.nn.softmax(e, axis=1)
    a = jnp.where(mask, a, 0.0)
    rst = jnp.einsum('vuh,uhf->vhf', a, fsrc) + bias_hf.reshape(1, H, F)
    return rst


if __name__ == "__main__":
    key = jax.random.PRNGKey(0)
    k_feat, k_w, k_al, k_ar, k_adj = jax.random.split(key, 5)

    # deterministic "xavier_normal with gain=sqrt(2)"-style initialization
    gain = jnp.sqrt(2.0)
    std_fc = gain * jnp.sqrt(2.0 / (D_IN + H * F))
    # torch fc.weight is (H*F, D_in); we store its transpose split per head: (H, D_in, F)
    w_t = std_fc * jax.random.normal(k_w, (D_IN, H * F), dtype=jnp.float32)
    w_hdf = jnp.transpose(w_t.reshape(D_IN, H, F), (1, 0, 2))          # (H, D_in, F)

    std_attn = gain * jnp.sqrt(2.0 / (H * F + F))
    attn_l = std_attn * jax.random.normal(k_al, (H, 1, F), dtype=jnp.float32)
    attn_r = std_attn * jax.random.normal(k_ar, (H, 1, F), dtype=jnp.float32)
    bias_hf = jnp.zeros((H, 1, F), dtype=jnp.float32)                  # nn.init.constant_(bias, 0)

    feat = jax.random.normal(k_feat, (N, D_IN), dtype=jnp.float32)

    # synthetic graph: random directed edges + self loops (no zero in-degree nodes)
    adj = jax.random.bernoulli(k_adj, 0.3, (N, N)).astype(jnp.float32)
    adj = jnp.maximum(adj, jnp.eye(N, dtype=jnp.float32))              # adj[dst, src]

    out = gat_forward(feat, w_hdf, attn_l, attn_r, adj, bias_hf)
    out = jax.block_until_ready(out)

    ref = gat_reference(feat, w_hdf, attn_l, attn_r, adj, bias_hf)
    assert out.shape == (N, H, F)
    assert jnp.allclose(out, ref, atol=1e-4, rtol=1e-4), (
        float(jnp.max(jnp.abs(out - ref))))

    print("KERNEL_OK")
</pallas_src>

<mosaic_0001>
module attributes {stable_mosaic.version = 11 : i64} {
  func.func @_gat_fused_kernel(%arg0: memref<32x16xf32, #tpu.memory_space<vmem>>, %arg1: memref<16x32xf32, #tpu.memory_space<vmem>>, %arg2: memref<16x32xf32, #tpu.memory_space<vmem>>, %arg3: memref<4x16xf32, #tpu.memory_space<vmem>>, %arg4: memref<16x4xf32, #tpu.memory_space<vmem>>, %arg5: memref<32x32xf32, #tpu.memory_space<vmem>>, %arg6: memref<1x32xf32, #tpu.memory_space<vmem>>, %arg7: memref<32x32xf32, #tpu.memory_space<vmem>>) attributes {dimension_semantics = [], scalar_prefetch = 0 : i64, scratch_operands = 0 : i64, tpu.core_type = #tpu.core_type<tc>} {
    %c0 = arith.constant 0 : index
    %c0_0 = arith.constant 0 : index
    %0 = vector.load %arg0[%c0, %c0_0] : memref<32x16xf32, #tpu.memory_space<vmem>>, vector<32x16xf32>
    %c0_1 = arith.constant 0 : index
    %c0_2 = arith.constant 0 : index
    %1 = vector.load %arg2[%c0_1, %c0_2] : memref<16x32xf32, #tpu.memory_space<vmem>>, vector<16x32xf32>
    %cst = arith.constant dense<0.000000e+00> : vector<32x32xf32>
    %2 = tpu.matmul %0, %1, %cst {dimension_numbers = #tpu.dot_dimension_numbers<[1], [0], [0], [1], [0, 0, 1, 1], [], []>} : vector<32x16xf32>, vector<16x32xf32>, vector<32x32xf32> -> vector<32x32xf32>
    %c0_3 = arith.constant 0 : index
    %c0_4 = arith.constant 0 : index
    %3 = vector.load %arg3[%c0_3, %c0_4] : memref<4x16xf32, #tpu.memory_space<vmem>>, vector<4x16xf32>
    %c0_5 = arith.constant 0 : index
    %c0_6 = arith.constant 0 : index
    %4 = vector.load %arg1[%c0_5, %c0_6] : memref<16x32xf32, #tpu.memory_space<vmem>>, vector<16x32xf32>
    %cst_7 = arith.constant dense<0.000000e+00> : vector<4x32xf32>
    %5 = tpu.matmul %3, %4, %cst_7 {dimension_numbers = #tpu.dot_dimension_numbers<[1], [0], [0], [1], [0, 0, 1, 1], [], []>} : vector<4x16xf32>, vector<16x32xf32>, vector<4x32xf32> -> vector<4x32xf32>
    %c0_8 = arith.constant 0 : index
    %c0_9 = arith.constant 0 : index
    %6 = vector.load %arg4[%c0_8, %c0_9] : memref<16x4xf32, #tpu.memory_space<vmem>>, vector<16x4xf32>
    %cst_10 = arith.constant dense<0.000000e+00> : vector<32x4xf32>
    %7 = tpu.matmul %0, %6, %cst_10 {dimension_numbers = #tpu.dot_dimension_numbers<[1], [0], [0], [1], [0, 0, 1, 1], [], []>} : vector<32x16xf32>, vector<16x4xf32>, vector<32x4xf32> -> vector<32x4xf32>
    %c0_11 = arith.constant 0 : index
    %c0_12 = arith.constant 0 : index
    %8 = vector.load %arg5[%c0_11, %c0_12] : memref<32x32xf32, #tpu.memory_space<vmem>>, vector<32x32xf32>
    %9 = vector.extract_strided_slice %7 {offsets = [0, 0], sizes = [32, 1], strides = [1, 1]} : vector<32x4xf32> to vector<32x1xf32>
    %10 = vector.extract_strided_slice %5 {offsets = [0, 0], sizes = [1, 32], strides = [1, 1]} : vector<4x32xf32> to vector<1x32xf32>
    %11 = vector.broadcast %9 : vector<32x1xf32> to vector<32x32xf32>
    %12 = vector.broadcast %10 : vector<1x32xf32> to vector<32x32xf32>
    %13 = arith.addf %11, %12 : vector<32x32xf32>
    %cst_13 = arith.constant 0.000000e+00 : f32
    %14 = vector.broadcast %cst_13 : f32 to vector<32x32xf32>
    %15 = arith.cmpf oge, %13, %14 : vector<32x32xf32>
    %cst_14 = arith.constant 2.000000e-01 : f32
    %16 = vector.broadcast %cst_14 : f32 to vector<32x32xf32>
    %17 = arith.mulf %16, %13 : vector<32x32xf32>
    %18 = arith.select %15, %13, %17 : vector<32x32xi1>, vector<32x32xf32>
    %19 = arith.addf %18, %8 : vector<32x32xf32>
    %cst_15 = arith.constant dense<0xFF800000> : vector<32xf32>
    %20 = vector.multi_reduction <maximumf>, %19, %cst_15 [1] : vector<32x32xf32> to vector<32xf32>
    %21 = vector.shape_cast %20 : vector<32xf32> to vector<32x1xf32>
    %22 = vector.broadcast %21 : vector<32x1xf32> to vector<32x32xf32>
    %23 = arith.subf %19, %22 : vector<32x32xf32>
    %24 = math.exp %23 : vector<32x32xf32>
    %cst_16 = arith.constant dense<0.000000e+00> : vector<32xf32>
    %25 = vector.multi_reduction <add>, %24, %cst_16 [1] : vector<32x32xf32> to vector<32xf32>
    %26 = vector.shape_cast %25 : vector<32xf32> to vector<32x1xf32>
    %27 = tpu.reciprocal %26 : vector<32x1xf32> -> vector<32x1xf32>
    %28 = vector.broadcast %27 : vector<32x1xf32> to vector<32x32xf32>
    %29 = arith.mulf %24, %28 : vector<32x32xf32>
    %30 = vector.extract_strided_slice %2 {offsets = [0, 0], sizes = [32, 8], strides = [1, 1]} : vector<32x32xf32> to vector<32x8xf32>
    %cst_17 = arith.constant dense<0.000000e+00> : vector<32x8xf32>
    %31 = tpu.matmul %29, %30, %cst_17 {dimension_numbers = #tpu.dot_dimension_numbers<[1], [0], [0], [1], [0, 0, 1, 1], [], []>} : vector<32x32xf32>, vector<32x8xf32>, vector<32x8xf32> -> vector<32x8xf32>
    %32 = vector.extract_strided_slice %7 {offsets = [0, 1], sizes = [32, 1], strides = [1, 1]} : vector<32x4xf32> to vector<32x1xf32>
    %33 = vector.extract_strided_slice %5 {offsets = [1, 0], sizes = [1, 32], strides = [1, 1]} : vector<4x32xf32> to vector<1x32xf32>
    %34 = vector.broadcast %32 : vector<32x1xf32> to vector<32x32xf32>
    %35 = vector.broadcast %33 : vector<1x32xf32> to vector<32x32xf32>
    %36 = arith.addf %34, %35 : vector<32x32xf32>
    %cst_18 = arith.constant 0.000000e+00 : f32
    %37 = vector.broadcast %cst_18 : f32 to vector<32x32xf32>
    %38 = arith.cmpf oge, %36, %37 : vector<32x32xf32>
    %cst_19 = arith.constant 2.000000e-01 : f32
    %39 = vector.broadcast %cst_19 : f32 to vector<32x32xf32>
    %40 = arith.mulf %39, %36 : vector<32x32xf32>
    %41 = arith.select %38, %36, %40 : vector<32x32xi1>, vector<32x32xf32>
    %42 = arith.addf %41, %8 : vector<32x32xf32>
    %cst_20 = arith.constant dense<0xFF800000> : vector<32xf32>
    %43 = vector.multi_reduction <maximumf>, %42, %cst_20 [1] : vector<32x32xf32> to vector<32xf32>
    %44 = vector.shape_cast %43 : vector<32xf32> to vector<32x1xf32>
    %45 = vector.broadcast %44 : vector<32x1xf32> to vector<32x32xf32>
    %46 = arith.subf %42, %45 : vector<32x32xf32>
    %47 = math.exp %46 : vector<32x32xf32>
    %cst_21 = arith.constant dense<0.000000e+00> : vector<32xf32>
    %48 = vector.multi_reduction <add>, %47, %cst_21 [1] : vector<32x32xf32> to vector<32xf32>
    %49 = vector.shape_cast %48 : vector<32xf32> to vector<32x1xf32>
    %50 = tpu.reciprocal %49 : vector<32x1xf32> -> vector<32x1xf32>
    %51 = vector.broadcast %50 : vector<32x1xf32> to vector<32x32xf32>
    %52 = arith.mulf %47, %51 : vector<32x32xf32>
    %53 = vector.extract_strided_slice %2 {offsets = [0, 8], sizes = [32, 8], strides = [1, 1]} : vector<32x32xf32> to vector<32x8xf32>
    %cst_22 = arith.constant dense<0.000000e+00> : vector<32x8xf32>
    %54 = tpu.matmul %52, %53, %cst_22 {dimension_numbers = #tpu.dot_dimension_numbers<[1], [0], [0], [1], [0, 0, 1, 1], [], []>} : vector<32x32xf32>, vector<32x8xf32>, vector<32x8xf32> -> vector<32x8xf32>
    %55 = vector.extract_strided_slice %7 {offsets = [0, 2], sizes = [32, 1], strides = [1, 1]} : vector<32x4xf32> to vector<32x1xf32>
    %56 = vector.extract_strided_slice %5 {offsets = [2, 0], sizes = [1, 32], strides = [1, 1]} : vector<4x32xf32> to vector<1x32xf32>
    %57 = vector.broadcast %55 : vector<32x1xf32> to vector<32x32xf32>
    %58 = vector.broadcast %56 : vector<1x32xf32> to vector<32x32xf32>
    %59 = arith.addf %57, %58 : vector<32x32xf32>
    %cst_23 = arith.constant 0.000000e+00 : f32
    %60 = vector.broadcast %cst_23 : f32 to vector<32x32xf32>
    %61 = arith.cmpf oge, %59, %60 : vector<32x32xf32>
    %cst_24 = arith.constant 2.000000e-01 : f32
    %62 = vector.broadcast %cst_24 : f32 to vector<32x32xf32>
    %63 = arith.mulf %62, %59 : vector<32x32xf32>
    %64 = arith.select %61, %59, %63 : vector<32x32xi1>, vector<32x32xf32>
    %65 = arith.addf %64, %8 : vector<32x32xf32>
    %cst_25 = arith.constant dense<0xFF800000> : vector<32xf32>
    %66 = vector.multi_reduction <maximumf>, %65, %cst_25 [1] : vector<32x32xf32> to vector<32xf32>
    %67 = vector.shape_cast %66 : vector<32xf32> to vector<32x1xf32>
    %68 = vector.broadcast %67 : vector<32x1xf32> to vector<32x32xf32>
    %69 = arith.subf %65, %68 : vector<32x32xf32>
    %70 = math.exp %69 : vector<32x32xf32>
    %cst_26 = arith.constant dense<0.000000e+00> : vector<32xf32>
    %71 = vector.multi_reduction <add>, %70, %cst_26 [1] : vector<32x32xf32> to vector<32xf32>
    %72 = vector.shape_cast %71 : vector<32xf32> to vector<32x1xf32>
    %73 = tpu.reciprocal %72 : vector<32x1xf32> -> vector<32x1xf32>
    %74 = vector.broadcast %73 : vector<32x1xf32> to vector<32x32xf32>
    %75 = arith.mulf %70, %74 : vector<32x32xf32>
    %76 = vector.extract_strided_slice %2 {offsets = [0, 16], sizes = [32, 8], strides = [1, 1]} : vector<32x32xf32> to vector<32x8xf32>
    %cst_27 = arith.constant dense<0.000000e+00> : vector<32x8xf32>
    %77 = tpu.matmul %75, %76, %cst_27 {dimension_numbers = #tpu.dot_dimension_numbers<[1], [0], [0], [1], [0, 0, 1, 1], [], []>} : vector<32x32xf32>, vector<32x8xf32>, vector<32x8xf32> -> vector<32x8xf32>
    %78 = vector.extract_strided_slice %7 {offsets = [0, 3], sizes = [32, 1], strides = [1, 1]} : vector<32x4xf32> to vector<32x1xf32>
    %79 = vector.extract_strided_slice %5 {offsets = [3, 0], sizes = [1, 32], strides = [1, 1]} : vector<4x32xf32> to vector<1x32xf32>
    %80 = vector.broadcast %78 : vector<32x1xf32> to vector<32x32xf32>
    %81 = vector.broadcast %79 : vector<1x32xf32> to vector<32x32xf32>
    %82 = arith.addf %80, %81 : vector<32x32xf32>
    %cst_28 = arith.constant 0.000000e+00 : f32
    %83 = vector.broadcast %cst_28 : f32 to vector<32x32xf32>
    %84 = arith.cmpf oge, %82, %83 : vector<32x32xf32>
    %cst_29 = arith.constant 2.000000e-01 : f32
    %85 = vector.broadcast %cst_29 : f32 to vector<32x32xf32>
    %86 = arith.mulf %85, %82 : vector<32x32xf32>
    %87 = arith.select %84, %82, %86 : vector<32x32xi1>, vector<32x32xf32>
    %88 = arith.addf %87, %8 : vector<32x32xf32>
    %cst_30 = arith.constant dense<0xFF800000> : vector<32xf32>
    %89 = vector.multi_reduction <maximumf>, %88, %cst_30 [1] : vector<32x32xf32> to vector<32xf32>
    %90 = vector.shape_cast %89 : vector<32xf32> to vector<32x1xf32>
    %91 = vector.broadcast %90 : vector<32x1xf32> to vector<32x32xf32>
    %92 = arith.subf %88, %91 : vector<32x32xf32>
    %93 = math.exp %92 : vector<32x32xf32>
    %cst_31 = arith.constant dense<0.000000e+00> : vector<32xf32>
    %94 = vector.multi_reduction <add>, %93, %cst_31 [1] : vector<32x32xf32> to vector<32xf32>
    %95 = vector.shape_cast %94 : vector<32xf32> to vector<32x1xf32>
    %96 = tpu.reciprocal %95 : vector<32x1xf32> -> vector<32x1xf32>
    %97 = vector.broadcast %96 : vector<32x1xf32> to vector<32x32xf32>
    %98 = arith.mulf %93, %97 : vector<32x32xf32>
    %99 = vector.extract_strided_slice %2 {offsets = [0, 24], sizes = [32, 8], strides = [1, 1]} : vector<32x32xf32> to vector<32x8xf32>
    %cst_32 = arith.constant dense<0.000000e+00> : vector<32x8xf32>
    %100 = tpu.matmul %98, %99, %cst_32 {dimension_numbers = #tpu.dot_dimension_numbers<[1], [0], [0], [1], [0, 0, 1, 1], [], []>} : vector<32x32xf32>, vector<32x8xf32>, vector<32x8xf32> -> vector<32x8xf32>
    %101 = tpu.concatenate %31, %54, %77, %100 in 1 : vector<32x8xf32>, vector<32x8xf32>, vector<32x8xf32>, vector<32x8xf32> -> vector<32x32xf32>
    %c0_33 = arith.constant 0 : index
    %c0_34 = arith.constant 0 : index
    %102 = vector.load %arg6[%c0_33, %c0_34] : memref<1x32xf32, #tpu.memory_space<vmem>>, vector<1x32xf32>
    %103 = vector.broadcast %102 : vector<1x32xf32> to vector<32x32xf32>
    %104 = arith.addf %101, %103 : vector<32x32xf32>
    %c0_35 = arith.constant 0 : index
    %c0_36 = arith.constant 0 : index
    %105 = vector.load %arg7[%c0_35, %c0_36] : memref<32x32xf32, #tpu.memory_space<vmem>>, vector<32x32xf32>
    tpu.vector_store %arg7[%c0_35, %c0_36], %104 {strides = array<i32>} : memref<32x32xf32, #tpu.memory_space<vmem>>, vector<32x32xf32>,
    return
  }
}

</mosaic_0001>

<llo_original>
// kernel: tpu_custom_call.1
$region0: #{tpu_custom_call.1}
  #allocation0 [shape = 'u32[]', space=smem, size = 0x4, offset = 0x4, fixed_abs, tag = 'smem constant byte address 0x4 - core index']
  #allocation1 [shape = 'u32[72,128]{1,0:T(1,128)}', space=vmem, size = 0x9000, scoped, tag = 'internal scratch']
  %s0 = inlined_call_operand.vmem [shape: f32[32,16], index: 0, kind: input, shape index: {}]
  %s1 = inlined_call_operand.vmem [shape: f32[16,32], index: 1, kind: input, shape index: {}]
  %s2 = inlined_call_operand.hbm [shape: f32[16,32], index: 2, kind: input, shape index: {}]
  %s3 = inlined_call_operand.vmem [shape: f32[4,16], index: 3, kind: input, shape index: {}]
  %s4 = inlined_call_operand.vmem [shape: f32[16,4], index: 4, kind: input, shape index: {}]
  %s5 = inlined_call_operand.vmem [shape: f32[32,32], index: 5, kind: input, shape index: {}]
  %s6 = inlined_call_operand.vmem [shape: f32[1,32], index: 6, kind: input, shape index: {}]
  %s7 = inlined_call_operand.hbm [shape: f32[32,32], index: 7, kind: output, shape index: {}]
  %s8 = sld [smem:[#allocation0]]
  $region42: #{tpu_custom_call.1} parent=0
    _
  %s10 = ssub.s32 1, %s8
  %s11 = scalar_select 0, %s10, %s8
  $region1: #{tpu_custom_call.1} parent=0
    #allocation2 [shape = 'u8[8192]{0}', space=vmem, size = 0x2000, scoped, tag = 'input window, operand 2, single buffered']
    #allocation3 [shape = 's32[1]{0}', space=sflag, size = 0x4, scoped, tag = 'scoped memory for tpu_custom_call.1']
    #allocation4 [shape = 's32[1]{0}', space=sflag, size = 0x4, scoped, tag = 'scoped memory for tpu_custom_call.1']
    #allocation5 [shape = 'u8[16384]{0}', space=vmem, size = 0x4000, scoped, tag = 'output window, operand 0, single buffered']
    %12 = vsyncpa [#allocation3], 0
    %13 = vsyncpa [#allocation4], 0
    // Predicated region
    $region2: #{tpu_custom_call.1} parent=1 // pred_check
      _
    $region3: #{tpu_custom_call.1} parent=1 // pred_check_branch
      %15 = sbr.rel (0) target = $region5
    $region4: #{tpu_custom_call.1} parent=1 // pred_region
      _
    $region5: #{tpu_custom_call.1} parent=1 // pred_fallthru
      _
    // Predicated region
    $region6: #{tpu_custom_call.1} parent=1 // pred_check
      _
    $region7: #{tpu_custom_call.1} parent=1 // pred_check_branch
      %17 = sbr.rel (0) target = $region9
    $region8: #{tpu_custom_call.1} parent=1 // pred_region
      _
    $region9: #{tpu_custom_call.1} parent=1 // pred_fallthru
      _
    // Predicated region
    $region10: #{tpu_custom_call.1} parent=1 // pred_check
      _
    $region11: #{tpu_custom_call.1} parent=1 // pred_check_branch
      %19 = sbr.rel (0) target = $region13
    $region12: #{tpu_custom_call.1} parent=1 // pred_region
      %21 = vsyncadd [#allocation3], 0
      %s22 = sshll.u32 %s2, 4
      %s23 = int_to_ptr.hbm [resolvable:$true] %s22
      %s24 = sshll.u32 [#allocation2], 4
      %s25 = int_to_ptr.vmem [resolvable:$true] %s24
      %30 = dma.hbm_to_vmem [thread:$0]  %s23, 256, %s25, [#allocation3], 128, 128, 8
    $region13: #{tpu_custom_call.1} parent=1 // pred_fallthru
      _
    // Predicated region
    $region14: #{tpu_custom_call.1} parent=1 // pred_check
      _
    $region15: #{tpu_custom_call.1} parent=1 // pred_check_branch
      %32 = sbr.rel (0) target = $region17
    $region16: #{tpu_custom_call.1} parent=1 // pred_region
      _
    $region17: #{tpu_custom_call.1} parent=1 // pred_fallthru
      _
    // Predicated region
    $region18: #{tpu_custom_call.1} parent=1 // pred_check
      _
    $region19: #{tpu_custom_call.1} parent=1 // pred_check_branch
      %34 = sbr.rel (0) target = $region21
    $region20: #{tpu_custom_call.1} parent=1 // pred_region
      _
    $region21: #{tpu_custom_call.1} parent=1 // pred_fallthru
      _
    // Predicated region
    $region22: #{tpu_custom_call.1} parent=1 // pred_check
      _
    $region23: #{tpu_custom_call.1} parent=1 // pred_check_branch
      %36 = sbr.rel (0) target = $region25
    $region24: #{tpu_custom_call.1} parent=1 // pred_region
      _
    $region25: #{tpu_custom_call.1} parent=1 // pred_fallthru
      _
    // Predicated region
    $region26: #{tpu_custom_call.1} parent=1 // pred_check
      _
    $region27: #{tpu_custom_call.1} parent=1 // pred_check_branch
      %38 = sbr.rel (0) target = $region29
    $region28: #{tpu_custom_call.1} parent=1 // pred_region
      _
    $region29: #{tpu_custom_call.1} parent=1 // pred_fallthru
      _
    // Predicated region
    $region30: #{tpu_custom_call.1} parent=1 // pred_check
      _
    $region31: #{tpu_custom_call.1} parent=1 // pred_check_branch
      %40 = sbr.rel (0) target = $region33
    $region32: #{tpu_custom_call.1} parent=1 // pred_region
      %42 = dma.done [#allocation3], 256
    $region33: #{tpu_custom_call.1} parent=1 // pred_fallthru
      _
    %v43 = vld [vmem:[%s0] sm:$0xff]
    %v44 = vld [vmem:[%s0 + $0x8] sm:$0xff]
    %v45 = vld [vmem:[%s0 + $0x10] sm:$0xff]
    %v46 = vld [vmem:[%s0 + $0x18] sm:$0xff]
    %v47 = vld [vmem:[#allocation2] sm:$0xff]
    %v48 = vld [vmem:[#allocation2 + $0x8] sm:$0xff]
    %vm49 = vcmask 130048
    %v51 = vsel %vm49, %v43, 0
    %v54 = vsel %vm49, %v44, 0
    %v57 = vsel %vm49, %v45, 0
    %v60 = vsel %vm49, %v46, 0
    %62 = vmatpush.msra.mxu0 0.0
    %63 = vmatpush.msra.mxu0 0.0
    %64 = vmatpush.msra.mxu0 0.0
    %65 = vmatpush.msra.mxu0 0.0
    %66 = vmatpush.msra.mxu0 0.0
    %67 = vmatpush.msra.mxu0 0.0
    %68 = vmatpush.msra.mxu0 0.0
    %69 = vmatpush.msra.mxu0 0.0
    %70 = vmatpush.msra.mxu0 0.0
    %71 = vmatpush.msra.mxu0 0.0
    %72 = vmatpush.msra.mxu0 0.0
    %73 = vmatpush.msra.mxu0 0.0
    %74 = vmatpush.msra.mxu0 0.0
    %75 = vmatpush.msra.mxu0 0.0
    %76 = vmatpush.msra.mxu0 %v48
    %77 = vmatpush.msra.mxu0 %v47
    %78 = vmatmul.f32.gmra.mxu0 %v51
    %v79 = vpop.f32.mrf.mxu0
    %v80 = vadd.f32 0.0, %v79
    %81 = vmatmul.f32.gmra.mxu0 %v54
    %v82 = vpop.f32.mrf.mxu0
    %v83 = vadd.f32 0.0, %v82
    %84 = vmatmul.f32.gmra.mxu0 %v57
    %v85 = vpop.f32.mrf.mxu0
    %v86 = vadd.f32 0.0, %v85
    %87 = vmatmul.f32.gmra.mxu0 %v60
    %v88 = vpop.f32.mrf.mxu0
    %v89 = vadd.f32 0.0, %v88
    %90 = vdwg.mxu0
    %v91 = vld [vmem:[%s3] sm:$0xf]
    %v92 = vld [vmem:[%s1] sm:$0xff]
    %v93 = vld [vmem:[%s1 + $0x8] sm:$0xff]
    %v95 = vsel %vm49, %v91, 0
    %97 = vmatpush.msra.mxu0 0.0
    %98 = vmatpush.msra.mxu0 0.0
    %99 = vmatpush.msra.mxu0 0.0
    %100 = vmatpush.msra.mxu0 0.0
    %101 = vmatpush.msra.mxu0 0.0
    %102 = vmatpush.msra.mxu0 0.0
    %103 = vmatpush.msra.mxu0 0.0
    %104 = vmatpush.msra.mxu0 0.0
    %105 = vmatpush.msra.mxu0 0.0
    %106 = vmatpush.msra.mxu0 0.0
    %107 = vmatpush.msra.mxu0 0.0
    %108 = vmatpush.msra.mxu0 0.0
    %109 = vmatpush.msra.mxu0 0.0
    %110 = vmatpush.msra.mxu0 0.0
    %111 = vmatpush.msra.mxu0 %v93
    %112 = vmatpush.msra.mxu0 %v92
    %113 = vmatmul.f32.gmra.mxu0 %v95
    %v114 = vpop.f32.mrf.mxu0
    %v115 = vadd.f32 0.0, %v114
    %116 = vdwg.mxu0
    %v117 = vld [vmem:[%s4] sm:$0xff]
    %v118 = vld [vmem:[%s4 + $0x8] sm:$0xff]
    %119 = vmatpush.msra.mxu0 0.0
    %120 = vmatpush.msra.mxu0 0.0
    %121 = vmatpush.msra.mxu0 0.0
    %122 = vmatpush.msra.mxu0 0.0
    %123 = vmatpush.msra.mxu0 0.0
    %124 = vmatpush.msra.mxu0 0.0
    %125 = vmatpush.msra.mxu0 0.0
    %126 = vmatpush.msra.mxu0 0.0
    %127 = vmatpush.msra.mxu0 0.0
    %128 = vmatpush.msra.mxu0 0.0
    %129 = vmatpush.msra.mxu0 0.0
    %130 = vmatpush.msra.mxu0 0.0
    %131 = vmatpush.msra.mxu0 0.0
    %132 = vmatpush.msra.mxu0 0.0
    %133 = vmatpush.msra.mxu0 %v118
    %134 = vmatpush.msra.mxu0 %v117
    %135 = vmatmul.f32.gmra.mxu0 %v51
    %v136 = vpop.f32.mrf.mxu0
    %v137 = vadd.f32 0.0, %v136
    %138 = vmatmul.f32.gmra.mxu0 %v54
    %v139 = vpop.f32.mrf.mxu0
    %v140 = vadd.f32 0.0, %v139
    %141 = vmatmul.f32.gmra.mxu0 %v57
    %v142 = vpop.f32.mrf.mxu0
    %v143 = vadd.f32 0.0, %v142
    %144 = vmatmul.f32.gmra.mxu0 %v60
    %v145 = vpop.f32.mrf.mxu0
    %v146 = vadd.f32 0.0, %v145
    %147 = vdwg.mxu0
    %v148 = vld [vmem:[%s5] sm:$0xff]
    %v149 = vld [vmem:[%s5 + $0x8] sm:$0xff]
    %v150 = vld [vmem:[%s5 + $0x10] sm:$0xff]
    %v151 = vld [vmem:[%s5 + $0x18] sm:$0xff]
    %153 = vset.pattern.permute.xlu0 0
    %154 = vperm.xlu0 %153, %v137
    %v155 = vpop.permute.xlu0 %154
    %158 = vset.pattern.permute.xlu0 0
    %159 = vperm.xlu0 %158, %v140
    %v160 = vpop.permute.xlu0 %159
    %163 = vset.pattern.permute.xlu0 0
    %164 = vperm.xlu0 %163, %v143
    %v165 = vpop.permute.xlu0 %164
    %168 = vset.pattern.permute.xlu0 0
    %169 = vperm.xlu0 %168, %v146
    %v170 = vpop.permute.xlu0 %169
    %v172 = vperm.slane %v115, 0
    %v173 = vadd.f32 %v155, %v172
    %v174 = vadd.f32 %v160, %v172
    %v175 = vadd.f32 %v165, %v172
    %v176 = vadd.f32 %v170, %v172
    %vm177 = vcmp.ge.f32.partialorder %v173, 0.0
    %vm178 = vcmp.ge.f32.partialorder %v174, 0.0
    %vm179 = vcmp.ge.f32.partialorder %v175, 0.0
    %vm180 = vcmp.ge.f32.partialorder %v176, 0.0
    %v181 = vmul.f32 %v173, 0.2
    %v182 = vmul.f32 %v174, 0.2
    %v183 = vmul.f32 %v175, 0.2
    %v184 = vmul.f32 %v176, 0.2
    %v185 = vsel %vm177, %v173, %v181
    %v186 = vsel %vm178, %v174, %v182
    %v187 = vsel %vm179, %v175, %v183
    %v188 = vsel %vm180, %v176, %v184
    %v189 = vadd.f32 %v185, %v148
    %v190 = vadd.f32 %v186, %v149
    %v191 = vadd.f32 %v187, %v150
    %v192 = vadd.f32 %v188, %v151
    %vm193 = vcmask 261120
    %v194 = vsel %vm193, %v189, -inf
    %195 = vmax.xlane.f32.xlu0 %v194
    %v196 = vpop.xlane.xlu0 %195
    %v197 = vsel %vm193, %v190, -inf
    %198 = vmax.xlane.f32.xlu0 %v197
    %v199 = vpop.xlane.xlu0 %198
    %v200 = vsel %vm193, %v191, -inf
    %201 = vmax.xlane.f32.xlu0 %v200
    %v202 = vpop.xlane.xlu0 %201
    %v203 = vsel %vm193, %v192, -inf
    %204 = vmax.xlane.f32.xlu0 %v203
    %v205 = vpop.xlane.xlu0 %204
    %v206 = vsub.f32 %v189, %v196
    %v207 = vsub.f32 %v190, %v199
    %v208 = vsub.f32 %v191, %v202
    %v209 = vsub.f32 %v192, %v205
    %v210 = vmul.f32 %v206, 1.442695
    %v211 = vpow.pop %v210
    %v212 = vmul.f32 %v207, 1.442695
    %v213 = vpow.pop %v212
    %v214 = vmul.f32 %v208, 1.442695
    %v215 = vpow.pop %v214
    %v216 = vmul.f32 %v209, 1.442695
    %v217 = vpow.pop %v216
    %v218 = vsel %vm193, %v211, 0.0
    %219 = vadd.xlane.f32.xlu0 %v218
    %v220 = vpop.xlane.xlu0 %219
    %v221 = vsel %vm193, %v213, 0.0
    %222 = vadd.xlane.f32.xlu0 %v221
    %v223 = vpop.xlane.xlu0 %222
    %v224 = vsel %vm193, %v215, 0.0
    %225 = vadd.xlane.f32.xlu0 %v224
    %v226 = vpop.xlane.xlu0 %225
    %v227 = vsel %vm193, %v217, 0.0
    %228 = vadd.xlane.f32.xlu0 %v227
    %v229 = vpop.xlane.xlu0 %228
    %v230 = vrcp.pop %v220
    %v231 = vmul.f32 %v220, %v230
    %v232 = vsub.f32 1.0, %v231
    %v233 = vmul.f32 %v230, %v232
    %v234 = vadd.f32 %v230, %v233
    %vm235 = vweird.f32 %v220
    %vm236 = vweird.f32 %v230
    %vm237 = vmor %vm235, %vm236
    %v238 = vsel %vm237, %v230, %v234
    %v239 = vand.u32 2147483647, %v220
    %vm240 = vcmp.eq.f32.partialorder %v239, 8.507059e+37
    %v241 = vand.u32 %v220, 2147483648
    %v242 = vor.u32 1.1754944e-38, %v241
    %v243 = vsel %vm240, %v242, %v238
    %v244 = vrcp.pop %v223
    %v245 = vmul.f32 %v223, %v244
    %v246 = vsub.f32 1.0, %v245
    %v247 = vmul.f32 %v244, %v246
    %v248 = vadd.f32 %v244, %v247
    %vm249 = vweird.f32 %v223
    %vm250 = vweird.f32 %v244
    %vm251 = vmor %vm249, %vm250
    %v252 = vsel %vm251, %v244, %v248
    %v253 = vand.u32 2147483647, %v223
    %vm254 = vcmp.eq.f32.partialorder %v253, 8.507059e+37
    %v255 = vand.u32 %v223, 2147483648
    %v256 = vor.u32 1.1754944e-38, %v255
    %v257 = vsel %vm254, %v256, %v252
    %v258 = vrcp.pop %v226
    %v259 = vmul.f32 %v226, %v258
    %v260 = vsub.f32 1.0, %v259
    %v261 = vmul.f32 %v258, %v260
    %v262 = vadd.f32 %v258, %v261
    %vm263 = vweird.f32 %v226
    %vm264 = vweird.f32 %v258
    %vm265 = vmor %vm263, %vm264
    %v266 = vsel %vm265, %v258, %v262
    %v267 = vand.u32 2147483647, %v226
    %vm268 = vcmp.eq.f32.partialorder %v267, 8.507059e+37
    %v269 = vand.u32 %v226, 2147483648
    %v270 = vor.u32 1.1754944e-38, %v269
    %v271 = vsel %vm268, %v270, %v266
    %v272 = vrcp.pop %v229
    %v273 = vmul.f32 %v229, %v272
    %v274 = vsub.f32 1.0, %v273
    %v275 = vmul.f32 %v272, %v274
    %v276 = vadd.f32 %v272, %v275
    %vm277 = vweird.f32 %v229
    %vm278 = vweird.f32 %v272
    %vm279 = vmor %vm277, %vm278
    %v280 = vsel %vm279, %v272, %v276
    %v281 = vand.u32 2147483647, %v229
    %vm282 = vcmp.eq.f32.partialorder %v281, 8.507059e+37
    %v283 = vand.u32 %v229, 2147483648
    %v284 = vor.u32 1.1754944e-38, %v283
    %v285 = vsel %vm282, %v284, %v280
    %v286 = vmul.f32 %v211, %v243
    %v287 = vmul.f32 %v213, %v257
    %v288 = vmul.f32 %v215, %v271
    %v289 = vmul.f32 %v217, %v285
    %v291 = vsel %vm193, %v286, 0
    %v294 = vsel %vm193, %v287, 0
    %v297 = vsel %vm193, %v288, 0
    %v300 = vsel %vm193, %v289, 0
    %302 = vmatpush.msra.mxu0 0.0
    %303 = vmatpush.msra.mxu0 0.0
    %304 = vmatpush.msra.mxu0 0.0
    %305 = vmatpush.msra.mxu0 0.0
    %306 = vmatpush.msra.mxu0 0.0
    %307 = vmatpush.msra.mxu0 0.0
    %308 = vmatpush.msra.mxu0 0.0
    %309 = vmatpush.msra.mxu0 0.0
    %310 = vmatpush.msra.mxu0 0.0
    %311 = vmatpush.msra.mxu0 0.0
    %312 = vmatpush.msra.mxu0 0.0
    %313 = vmatpush.msra.mxu0 0.0
    %314 = vmatpush.msra.mxu0 %v89
    %315 = vmatpush.msra.mxu0 %v86
    %316 = vmatpush.msra.mxu0 %v83
    %317 = vmatpush.msra.mxu0 %v80
    %318 = vmatmul.f32.gmra.mxu0 %v291
    %v319 = vpop.f32.mrf.mxu0
    %v320 = vadd.f32 0.0, %v319
    %321 = vmatmul.f32.gmra.mxu0 %v294
    %v322 = vpop.f32.mrf.mxu0
    %v323 = vadd.f32 0.0, %v322
    %324 = vmatmul.f32.gmra.mxu0 %v297
    %v325 = vpop.f32.mrf.mxu0
    %v326 = vadd.f32 0.0, %v325
    %327 = vmatmul.f32.gmra.mxu0 %v300
    %v328 = vpop.f32.mrf.mxu0
    %v329 = vadd.f32 0.0, %v328
    %330 = vdwg.mxu0
    %331 = vset.pattern.permute.xlu0 1
    %332 = vperm.xlu0 %331, %v137
    %v333 = vpop.permute.xlu0 %332
    %335 = vset.pattern.permute.xlu0 1
    %336 = vperm.xlu0 %335, %v140
    %v337 = vpop.permute.xlu0 %336
    %339 = vset.pattern.permute.xlu0 1
    %340 = vperm.xlu0 %339, %v143
    %v341 = vpop.permute.xlu0 %340
    %343 = vset.pattern.permute.xlu0 1
    %344 = vperm.xlu0 %343, %v146
    %v345 = vpop.permute.xlu0 %344
    %v347 = vperm.slane %v115, 1
    %v348 = vadd.f32 %v333, %v347
    %v349 = vadd.f32 %v337, %v347
    %v350 = vadd.f32 %v341, %v347
    %v351 = vadd.f32 %v345, %v347
    %vm352 = vcmp.ge.f32.partialorder %v348, 0.0
    %vm353 = vcmp.ge.f32.partialorder %v349, 0.0
    %vm354 = vcmp.ge.f32.partialorder %v350, 0.0
    %vm355 = vcmp.ge.f32.partialorder %v351, 0.0
    %v356 = vmul.f32 %v348, 0.2
    %v357 = vmul.f32 %v349, 0.2
    %v358 = vmul.f32 %v350, 0.2
    %v359 = vmul.f32 %v351, 0.2
    %v360 = vsel %vm352, %v348, %v356
    %v361 = vsel %vm353, %v349, %v357
    %v362 = vsel %vm354, %v350, %v358
    %v363 = vsel %vm355, %v351, %v359
    %v364 = vadd.f32 %v360, %v148
    %v365 = vadd.f32 %v361, %v149
    %v366 = vadd.f32 %v362, %v150
    %v367 = vadd.f32 %v363, %v151
    %v368 = vsel %vm193, %v364, -inf
    %369 = vmax.xlane.f32.xlu0 %v368
    %v370 = vpop.xlane.xlu0 %369
    %v371 = vsel %vm193, %v365, -inf
    %372 = vmax.xlane.f32.xlu0 %v371
    %v373 = vpop.xlane.xlu0 %372
    %v374 = vsel %vm193, %v366, -inf
    %375 = vmax.xlane.f32.xlu0 %v374
    %v376 = vpop.xlane.xlu0 %375
    %v377 = vsel %vm193, %v367, -inf
    %378 = vmax.xlane.f32.xlu0 %v377
    %v379 = vpop.xlane.xlu0 %378
    %v380 = vsub.f32 %v364, %v370
    %v381 = vsub.f32 %v365, %v373
    %v382 = vsub.f32 %v366, %v376
    %v383 = vsub.f32 %v367, %v379
    %v384 = vmul.f32 %v380, 1.442695
    %v385 = vpow.pop %v384
    %v386 = vmul.f32 %v381, 1.442695
    %v387 = vpow.pop %v386
    %v388 = vmul.f32 %v382, 1.442695
    %v389 = vpow.pop %v388
    %v390 = vmul.f32 %v383, 1.442695
    %v391 = vpow.pop %v390
    %v392 = vsel %vm193, %v385, 0.0
    %393 = vadd.xlane.f32.xlu0 %v392
    %v394 = vpop.xlane.xlu0 %393
    %v395 = vsel %vm193, %v387, 0.0
    %396 = vadd.xlane.f32.xlu0 %v395
    %v397 = vpop.xlane.xlu0 %396
    %v398 = vsel %vm193, %v389, 0.0
    %399 = vadd.xlane.f32.xlu0 %v398
    %v400 = vpop.xlane.xlu0 %399
    %v401 = vsel %vm193, %v391, 0.0
    %402 = vadd.xlane.f32.xlu0 %v401
    %v403 = vpop.xlane.xlu0 %402
    %v404 = vrcp.pop %v394
    %v405 = vmul.f32 %v394, %v404
    %v406 = vsub.f32 1.0, %v405
    %v407 = vmul.f32 %v404, %v406
    %v408 = vadd.f32 %v404, %v407
    %vm409 = vweird.f32 %v394
    %vm410 = vweird.f32 %v404
    %vm411 = vmor %vm409, %vm410
    %v412 = vsel %vm411, %v404, %v408
    %v413 = vand.u32 2147483647, %v394
    %vm414 = vcmp.eq.f32.partialorder %v413, 8.507059e+37
    %v415 = vand.u32 %v394, 2147483648
    %v416 = vor.u32 1.1754944e-38, %v415
    %v417 = vsel %vm414, %v416, %v412
    %v418 = vrcp.pop %v397
    %v419 = vmul.f32 %v397, %v418
    %v420 = vsub.f32 1.0, %v419
    %v421 = vmul.f32 %v418, %v420
    %v422 = vadd.f32 %v418, %v421
    %vm423 = vweird.f32 %v397
    %vm424 = vweird.f32 %v418
    %vm425 = vmor %vm423, %vm424
    %v426 = vsel %vm425, %v418, %v422
    %v427 = vand.u32 2147483647, %v397
    %vm428 = vcmp.eq.f32.partialorder %v427, 8.507059e+37
    %v429 = vand.u32 %v397, 2147483648
    %v430 = vor.u32 1.1754944e-38, %v429
    %v431 = vsel %vm428, %v430, %v426
    %v432 = vrcp.pop %v400
    %v433 = vmul.f32 %v400, %v432
    %v434 = vsub.f32 1.0, %v433
    %v435 = vmul.f32 %v432, %v434
    %v436 = vadd.f32 %v432, %v435
    %vm437 = vweird.f32 %v400
    %vm438 = vweird.f32 %v432
    %vm439 = vmor %vm437, %vm438
    %v440 = vsel %vm439, %v432, %v436
    %v441 = vand.u32 2147483647, %v400
    %vm442 = vcmp.eq.f32.partialorder %v441, 8.507059e+37
    %v443 = vand.u32 %v400, 2147483648
    %v444 = vor.u32 1.1754944e-38, %v443
    %v445 = vsel %vm442, %v444, %v440
    %v446 = vrcp.pop %v403
    %v447 = vmul.f32 %v403, %v446
    %v448 = vsub.f32 1.0, %v447
    %v449 = vmul.f32 %v446, %v448
    %v450 = vadd.f32 %v446, %v449
    %vm451 = vweird.f32 %v403
    %vm452 = vweird.f32 %v446
    %vm453 = vmor %vm451, %vm452
    %v454 = vsel %vm453, %v446, %v450
    %v455 = vand.u32 2147483647, %v403
    %vm456 = vcmp.eq.f32.partialorder %v455, 8.507059e+37
    %v457 = vand.u32 %v403, 2147483648
    %v458 = vor.u32 1.1754944e-38, %v457
    %v459 = vsel %vm456, %v458, %v454
    %v460 = vmul.f32 %v385, %v417
    %v461 = vmul.f32 %v387, %v431
    %v462 = vmul.f32 %v389, %v445
    %v463 = vmul.f32 %v391, %v459
    %468 = vrot.lane.b32.xlu0 %v80, 120
    %v469 = vpop.permute.xlu0 %468
    %470 = vrot.lane.b32.xlu0 %v83, 120
    %v471 = vpop.permute.xlu0 %470
    %472 = vrot.lane.b32.xlu0 %v86, 120
    %v473 = vpop.permute.xlu0 %472
    %474 = vrot.lane.b32.xlu0 %v89, 120
    %v475 = vpop.permute.xlu0 %474
    %v481 = vsel %vm193, %v460, 0
    %v484 = vsel %vm193, %v461, 0
    %v487 = vsel %vm193, %v462, 0
    %v490 = vsel %vm193, %v463, 0
    %492 = vmatpush.msra.mxu0 0.0
    %493 = vmatpush.msra.mxu0 0.0
    %494 = vmatpush.msra.mxu0 0.0
    %495 = vmatpush.msra.mxu0 0.0
    %496 = vmatpush.msra.mxu0 0.0
    %497 = vmatpush.msra.mxu0 0.0
    %498 = vmatpush.msra.mxu0 0.0
    %499 = vmatpush.msra.mxu0 0.0
    %500 = vmatpush.msra.mxu0 0.0
    %501 = vmatpush.msra.mxu0 0.0
    %502 = vmatpush.msra.mxu0 0.0
    %503 = vmatpush.msra.mxu0 0.0
    %504 = vmatpush.msra.mxu0 %v475
    %505 = vmatpush.msra.mxu0 %v473
    %506 = vmatpush.msra.mxu0 %v471
    %507 = vmatpush.msra.mxu0 %v469
    %508 = vmatmul.f32.gmra.mxu0 %v481
    %v509 = vpop.f32.mrf.mxu0
    %v510 = vadd.f32 0.0, %v509
    %511 = vmatmul.f32.gmra.mxu0 %v484
    %v512 = vpop.f32.mrf.mxu0
    %v513 = vadd.f32 0.0, %v512
    %514 = vmatmul.f32.gmra.mxu0 %v487
    %v515 = vpop.f32.mrf.mxu0
    %v516 = vadd.f32 0.0, %v515
    %517 = vmatmul.f32.gmra.mxu0 %v490
    %v518 = vpop.f32.mrf.mxu0
    %v519 = vadd.f32 0.0, %v518
    %520 = vdwg.mxu0
    %521 = vset.pattern.permute.xlu0 2
    %522 = vperm.xlu0 %521, %v137
    %v523 = vpop.permute.xlu0 %522
    %525 = vset.pattern.permute.xlu0 2
    %526 = vperm.xlu0 %525, %v140
    %v527 = vpop.permute.xlu0 %526
    %529 = vset.pattern.permute.xlu0 2
    %530 = vperm.xlu0 %529, %v143
    %v531 = vpop.permute.xlu0 %530
    %533 = vset.pattern.permute.xlu0 2
    %534 = vperm.xlu0 %533, %v146
    %v535 = vpop.permute.xlu0 %534
    %v537 = vperm.slane %v115, 2
    %v538 = vadd.f32 %v523, %v537
    %v539 = vadd.f32 %v527, %v537
    %v540 = vadd.f32 %v531, %v537
    %v541 = vadd.f32 %v535, %v537
    %vm542 = vcmp.ge.f32.partialorder %v538, 0.0
    %vm543 = vcmp.ge.f32.partialorder %v539, 0.0
    %vm544 = vcmp.ge.f32.partialorder %v540, 0.0
    %vm545 = vcmp.ge.f32.partialorder %v541, 0.0
    %v546 = vmul.f32 %v538, 0.2
    %v547 = vmul.f32 %v539, 0.2
    %v548 = vmul.f32 %v540, 0.2
    %v549 = vmul.f32 %v541, 0.2
    %v550 = vsel %vm542, %v538, %v546
    %v551 = vsel %vm543, %v539, %v547
    %v552 = vsel %vm544, %v540, %v548
    %v553 = vsel %vm545, %v541, %v549
    %v554 = vadd.f32 %v550, %v148
    %v555 = vadd.f32 %v551, %v149
    %v556 = vadd.f32 %v552, %v150
    %v557 = vadd.f32 %v553, %v151
    %v558 = vsel %vm193, %v554, -inf
    %559 = vmax.xlane.f32.xlu0 %v558
    %v560 = vpop.xlane.xlu0 %559
    %v561 = vsel %vm193, %v555, -inf
    %562 = vmax.xlane.f32.xlu0 %v561
    %v563 = vpop.xlane.xlu0 %562
    %v564 = vsel %vm193, %v556, -inf
    %565 = vmax.xlane.f32.xlu0 %v564
    %v566 = vpop.xlane.xlu0 %565
    %v567 = vsel %vm193, %v557, -inf
    %568 = vmax.xlane.f32.xlu0 %v567
    %v569 = vpop.xlane.xlu0 %568
    %v570 = vsub.f32 %v554, %v560
    %v571 = vsub.f32 %v555, %v563
    %v572 = vsub.f32 %v556, %v566
    %v573 = vsub.f32 %v557, %v569
    %v574 = vmul.f32 %v570, 1.442695
    %v575 = vpow.pop %v574
    %v576 = vmul.f32 %v571, 1.442695
    %v577 = vpow.pop %v576
    %v578 = vmul.f32 %v572, 1.442695
    %v579 = vpow.pop %v578
    %v580 = vmul.f32 %v573, 1.442695
    %v581 = vpow.pop %v580
    %v582 = vsel %vm193, %v575, 0.0
    %583 = vadd.xlane.f32.xlu0 %v582
    %v584 = vpop.xlane.xlu0 %583
    %v585 = vsel %vm193, %v577, 0.0
    %586 = vadd.xlane.f32.xlu0 %v585
    %v587 = vpop.xlane.xlu0 %586
    %v588 = vsel %vm193, %v579, 0.0
    %589 = vadd.xlane.f32.xlu0 %v588
    %v590 = vpop.xlane.xlu0 %589
    %v591 = vsel %vm193, %v581, 0.0
    %592 = vadd.xlane.f32.xlu0 %v591
    %v593 = vpop.xlane.xlu0 %592
    %v594 = vrcp.pop %v584
    %v595 = vmul.f32 %v584, %v594
    %v596 = vsub.f32 1.0, %v595
    %v597 = vmul.f32 %v594, %v596
    %v598 = vadd.f32 %v594, %v597
    %vm599 = vweird.f32 %v584
    %vm600 = vweird.f32 %v594
    %vm601 = vmor %vm599, %vm600
    %v602 = vsel %vm601, %v594, %v598
    %v603 = vand.u32 2147483647, %v584
    %vm604 = vcmp.eq.f32.partialorder %v603, 8.507059e+37
    %v605 = vand.u32 %v584, 2147483648
    %v606 = vor.u32 1.1754944e-38, %v605
    %v607 = vsel %vm604, %v606, %v602
    %v608 = vrcp.pop %v587
    %v609 = vmul.f32 %v587, %v608
    %v610 = vsub.f32 1.0, %v609
    %v611 = vmul.f32 %v608, %v610
    %v612 = vadd.f32 %v608, %v611
    %vm613 = vweird.f32 %v587
    %vm614 = vweird.f32 %v608
    %vm615 = vmor %vm613, %vm614
    %v616 = vsel %vm615, %v608, %v612
    %v617 = vand.u32 2147483647, %v587
    %vm618 = vcmp.eq.f32.partialorder %v617, 8.507059e+37
    %v619 = vand.u32 %v587, 2147483648
    %v620 = vor.u32 1.1754944e-38, %v619
    %v621 = vsel %vm618, %v620, %v616
    %v622 = vrcp.pop %v590
    %v623 = vmul.f32 %v590, %v622
    %v624 = vsub.f32 1.0, %v623
    %v625 = vmul.f32 %v622, %v624
    %v626 = vadd.f32 %v622, %v625
    %vm627 = vweird.f32 %v590
    %vm628 = vweird.f32 %v622
    %vm629 = vmor %vm627, %vm628
    %v630 = vsel %vm629, %v622, %v626
    %v631 = vand.u32 2147483647, %v590
    %vm632 = vcmp.eq.f32.partialorder %v631, 8.507059e+37
    %v633 = vand.u32 %v590, 2147483648
    %v634 = vor.u32 1.1754944e-38, %v633
    %v635 = vsel %vm632, %v634, %v630
    %v636 = vrcp.pop %v593
    %v637 = vmul.f32 %v593, %v636
    %v638 = vsub.f32 1.0, %v637
    %v639 = vmul.f32 %v636, %v638
    %v640 = vadd.f32 %v636, %v639
    %vm641 = vweird.f32 %v593
    %vm642 = vweird.f32 %v636
    %vm643 = vmor %vm641, %vm642
    %v644 = vsel %vm643, %v636, %v640
    %v645 = vand.u32 2147483647, %v593
    %vm646 = vcmp.eq.f32.partialorder %v645, 8.507059e+37
    %v647 = vand.u32 %v593, 2147483648
    %v648 = vor.u32 1.1754944e-38, %v647
    %v649 = vsel %vm646, %v648, %v644
    %v650 = vmul.f32 %v575, %v607
    %v651 = vmul.f32 %v577, %v621
    %v652 = vmul.f32 %v579, %v635
    %v653 = vmul.f32 %v581, %v649
    %654 = vrot.lane.b32.xlu0 %v80, 112
    %v655 = vpop.permute.xlu0 %654
    %656 = vrot.lane.b32.xlu0 %v83, 112
    %v657 = vpop.permute.xlu0 %656
    %658 = vrot.lane.b32.xlu0 %v86, 112
    %v659 = vpop.permute.xlu0 %658
    %660 = vrot.lane.b32.xlu0 %v89, 112
    %v661 = vpop.permute.xlu0 %660
    %v667 = vsel %vm193, %v650, 0
    %v670 = vsel %vm193, %v651, 0
    %v673 = vsel %vm193, %v652, 0
    %v676 = vsel %vm193, %v653, 0
    %678 = vmatpush.msra.mxu0 0.0
    %679 = vmatpush.msra.mxu0 0.0
    %680 = vmatpush.msra.mxu0 0.0
    %681 = vmatpush.msra.mxu0 0.0
    %682 = vmatpush.msra.mxu0 0.0
    %683 = vmatpush.msra.mxu0 0.0
    %684 = vmatpush.msra.mxu0 0.0
    %685 = vmatpush.msra.mxu0 0.0
    %686 = vmatpush.msra.mxu0 0.0
    %687 = vmatpush.msra.mxu0 0.0
    %688 = vmatpush.msra.mxu0 0.0
    %689 = vmatpush.msra.mxu0 0.0
    %690 = vmatpush.msra.mxu0 %v661
    %691 = vmatpush.msra.mxu0 %v659
    %692 = vmatpush.msra.mxu0 %v657
    %693 = vmatpush.msra.mxu0 %v655
    %694 = vmatmul.f32.gmra.mxu0 %v667
    %v695 = vpop.f32.mrf.mxu0
    %v696 = vadd.f32 0.0, %v695
    %697 = vmatmul.f32.gmra.mxu0 %v670
    %v698 = vpop.f32.mrf.mxu0
    %v699 = vadd.f32 0.0, %v698
    %700 = vmatmul.f32.gmra.mxu0 %v673
    %v701 = vpop.f32.mrf.mxu0
    %v702 = vadd.f32 0.0, %v701
    %703 = vmatmul.f32.gmra.mxu0 %v676
    %v704 = vpop.f32.mrf.mxu0
    %v705 = vadd.f32 0.0, %v704
    %706 = vdwg.mxu0
    %707 = vset.pattern.permute.xlu0 3
    %708 = vperm.xlu0 %707, %v137
    %v709 = vpop.permute.xlu0 %708
    %711 = vset.pattern.permute.xlu0 3
    %712 = vperm.xlu0 %711, %v140
    %v713 = vpop.permute.xlu0 %712
    %715 = vset.pattern.permute.xlu0 3
    %716 = vperm.xlu0 %715, %v143
    %v717 = vpop.permute.xlu0 %716
    %719 = vset.pattern.permute.xlu0 3
    %720 = vperm.xlu0 %719, %v146
    %v721 = vpop.permute.xlu0 %720
    %v723 = vperm.slane %v115, 3
    %v724 = vadd.f32 %v709, %v723
    %v725 = vadd.f32 %v713, %v723
    %v726 = vadd.f32 %v717, %v723
    %v727 = vadd.f32 %v721, %v723
    %vm728 = vcmp.ge.f32.partialorder %v724, 0.0
    %vm729 = vcmp.ge.f32.partialorder %v725, 0.0
    %vm730 = vcmp.ge.f32.partialorder %v726, 0.0
    %vm731 = vcmp.ge.f32.partialorder %v727, 0.0
    %v732 = vmul.f32 %v724, 0.2
    %v733 = vmul.f32 %v725, 0.2
    %v734 = vmul.f32 %v726, 0.2
    %v735 = vmul.f32 %v727, 0.2
    %v736 = vsel %vm728, %v724, %v732
    %v737 = vsel %vm729, %v725, %v733
    %v738 = vsel %vm730, %v726, %v734
    %v739 = vsel %vm731, %v727, %v735
    %v740 = vadd.f32 %v736, %v148
    %v741 = vadd.f32 %v737, %v149
    %v742 = vadd.f32 %v738, %v150
    %v743 = vadd.f32 %v739, %v151
    %v744 = vsel %vm193, %v740, -inf
    %745 = vmax.xlane.f32.xlu0 %v744
    %v746 = vpop.xlane.xlu0 %745
    %v747 = vsel %vm193, %v741, -inf
    %748 = vmax.xlane.f32.xlu0 %v747
    %v749 = vpop.xlane.xlu0 %748
    %v750 = vsel %vm193, %v742, -inf
    %751 = vmax.xlane.f32.xlu0 %v750
    %v752 = vpop.xlane.xlu0 %751
    %v753 = vsel %vm193, %v743, -inf
    %754 = vmax.xlane.f32.xlu0 %v753
    %v755 = vpop.xlane.xlu0 %754
    %v756 = vsub.f32 %v740, %v746
    %v757 = vsub.f32 %v741, %v749
    %v758 = vsub.f32 %v742, %v752
    %v759 = vsub.f32 %v743, %v755
    %v760 = vmul.f32 %v756, 1.442695
    %v761 = vpow.pop %v760
    %v762 = vmul.f32 %v757, 1.442695
    %v763 = vpow.pop %v762
    %v764 = vmul.f32 %v758, 1.442695
    %v765 = vpow.pop %v764
    %v766 = vmul.f32 %v759, 1.442695
    %v767 = vpow.pop %v766
    %v768 = vsel %vm193, %v761, 0.0
    %769 = vadd.xlane.f32.xlu0 %v768
    %v770 = vpop.xlane.xlu0 %769
    %v771 = vsel %vm193, %v763, 0.0
    %772 = vadd.xlane.f32.xlu0 %v771
    %v773 = vpop.xlane.xlu0 %772
    %v774 = vsel %vm193, %v765, 0.0
    %775 = vadd.xlane.f32.xlu0 %v774
    %v776 = vpop.xlane.xlu0 %775
    %v777 = vsel %vm193, %v767, 0.0
    %778 = vadd.xlane.f32.xlu0 %v777
    %v779 = vpop.xlane.xlu0 %778
    %v780 = vrcp.pop %v770
    %v781 = vmul.f32 %v770, %v780
    %v782 = vsub.f32 1.0, %v781
    %v783 = vmul.f32 %v780, %v782
    %v784 = vadd.f32 %v780, %v783
    %vm785 = vweird.f32 %v770
    %vm786 = vweird.f32 %v780
    %vm787 = vmor %vm785, %vm786
    %v788 = vsel %vm787, %v780, %v784
    %v789 = vand.u32 2147483647, %v770
    %vm790 = vcmp.eq.f32.partialorder %v789, 8.507059e+37
    %v791 = vand.u32 %v770, 2147483648
    %v792 = vor.u32 1.1754944e-38, %v791
    %v793 = vsel %vm790, %v792, %v788
    %v794 = vrcp.pop %v773
    %v795 = vmul.f32 %v773, %v794
    %v796 = vsub.f32 1.0, %v795
    %v797 = vmul.f32 %v794, %v796
    %v798 = vadd.f32 %v794, %v797
    %vm799 = vweird.f32 %v773
    %vm800 = vweird.f32 %v794
    %vm801 = vmor %vm799, %vm800
    %v802 = vsel %vm801, %v794, %v798
    %v803 = vand.u32 2147483647, %v773
    %vm804 = vcmp.eq.f32.partialorder %v803, 8.507059e+37
    %v805 = vand.u32 %v773, 2147483648
    %v806 = vor.u32 1.1754944e-38, %v805
    %v807 = vsel %vm804, %v806, %v802
    %v808 = vrcp.pop %v776
    %v809 = vmul.f32 %v776, %v808
    %v810 = vsub.f32 1.0, %v809
    %v811 = vmul.f32 %v808, %v810
    %v812 = vadd.f32 %v808, %v811
    %vm813 = vweird.f32 %v776
    %vm814 = vweird.f32 %v808
    %vm815 = vmor %vm813, %vm814
    %v816 = vsel %vm815, %v808, %v812
    %v817 = vand.u32 2147483647, %v776
    %vm818 = vcmp.eq.f32.partialorder %v817, 8.507059e+37
    %v819 = vand.u32 %v776, 2147483648
    %v820 = vor.u32 1.1754944e-38, %v819
    %v821 = vsel %vm818, %v820, %v816
    %v822 = vrcp.pop %v779
    %v823 = vmul.f32 %v779, %v822
    %v824 = vsub.f32 1.0, %v823
    %v825 = vmul.f32 %v822, %v824
    %v826 = vadd.f32 %v822, %v825
    %vm827 = vweird.f32 %v779
    %vm828 = vweird.f32 %v822
    %vm829 = vmor %vm827, %vm828
    %v830 = vsel %vm829, %v822, %v826
    %v831 = vand.u32 2147483647, %v779
    %vm832 = vcmp.eq.f32.partialorder %v831, 8.507059e+37
    %v833 = vand.u32 %v779, 2147483648
    %v834 = vor.u32 1.1754944e-38, %v833
    %v835 = vsel %vm832, %v834, %v830
    %v836 = vmul.f32 %v761, %v793
    %v837 = vmul.f32 %v763, %v807
    %v838 = vmul.f32 %v765, %v821
    %v839 = vmul.f32 %v767, %v835
    %840 = vrot.lane.b32.xlu0 %v80, 104
    %v841 = vpop.permute.xlu0 %840
    %842 = vrot.lane.b32.xlu0 %v83, 104
    %v843 = vpop.permute.xlu0 %842
    %844 = vrot.lane.b32.xlu0 %v86, 104
    %v845 = vpop.permute.xlu0 %844
    %846 = vrot.lane.b32.xlu0 %v89, 104
    %v847 = vpop.permute.xlu0 %846
    %v853 = vsel %vm193, %v836, 0
    %v856 = vsel %vm193, %v837, 0
    %v859 = vsel %vm193, %v838, 0
    %v862 = vsel %vm193, %v839, 0
    %864 = vmatpush.msra.mxu0 0.0
    %865 = vmatpush.msra.mxu0 0.0
    %866 = vmatpush.msra.mxu0 0.0
    %867 = vmatpush.msra.mxu0 0.0
    %868 = vmatpush.msra.mxu0 0.0
    %869 = vmatpush.msra.mxu0 0.0
    %870 = vmatpush.msra.mxu0 0.0
    %871 = vmatpush.msra.mxu0 0.0
    %872 = vmatpush.msra.mxu0 0.0
    %873 = vmatpush.msra.mxu0 0.0
    %874 = vmatpush.msra.mxu0 0.0
    %875 = vmatpush.msra.mxu0 0.0
    %876 = vmatpush.msra.mxu0 %v847
    %877 = vmatpush.msra.mxu0 %v845
    %878 = vmatpush.msra.mxu0 %v843
    %879 = vmatpush.msra.mxu0 %v841
    %880 = vmatmul.f32.gmra.mxu0 %v853
    %v881 = vpop.f32.mrf.mxu0
    %v882 = vadd.f32 0.0, %v881
    %883 = vmatmul.f32.gmra.mxu0 %v856
    %v884 = vpop.f32.mrf.mxu0
    %v885 = vadd.f32 0.0, %v884
    %886 = vmatmul.f32.gmra.mxu0 %v859
    %v887 = vpop.f32.mrf.mxu0
    %v888 = vadd.f32 0.0, %v887
    %889 = vmatmul.f32.gmra.mxu0 %v862
    %v890 = vpop.f32.mrf.mxu0
    %v891 = vadd.f32 0.0, %v890
    %892 = vdwg.mxu0
    %897 = vrot.lane.b32.xlu0 %v510, 8
    %v898 = vpop.permute.xlu0 %897
    %899 = vrot.lane.b32.xlu0 %v513, 8
    %v900 = vpop.permute.xlu0 %899
    %901 = vrot.lane.b32.xlu0 %v516, 8
    %v902 = vpop.permute.xlu0 %901
    %903 = vrot.lane.b32.xlu0 %v519, 8
    %v904 = vpop.permute.xlu0 %903
    %913 = vrot.lane.b32.xlu0 %v696, 16
    %v914 = vpop.permute.xlu0 %913
    %915 = vrot.lane.b32.xlu0 %v699, 16
    %v916 = vpop.permute.xlu0 %915
    %917 = vrot.lane.b32.xlu0 %v702, 16
    %v918 = vpop.permute.xlu0 %917
    %919 = vrot.lane.b32.xlu0 %v705, 16
    %v920 = vpop.permute.xlu0 %919
    %929 = vrot.lane.b32.xlu0 %v882, 24
    %v930 = vpop.permute.xlu0 %929
    %931 = vrot.lane.b32.xlu0 %v885, 24
    %v932 = vpop.permute.xlu0 %931
    %933 = vrot.lane.b32.xlu0 %v888, 24
    %v934 = vpop.permute.xlu0 %933
    %935 = vrot.lane.b32.xlu0 %v891, 24
    %v936 = vpop.permute.xlu0 %935
    %vm941 = vcmask 64512
    %v942 = vsel %vm941, %v320, %v898
    %v943 = vsel %vm941, %v323, %v900
    %v944 = vsel %vm941, %v326, %v902
    %v945 = vsel %vm941, %v329, %v904
    %v946 = vsel %vm49, %v942, %v914
    %v947 = vsel %vm49, %v943, %v916
    %v948 = vsel %vm49, %v944, %v918
    %v949 = vsel %vm49, %v945, %v920
    %vm950 = vcmask 195584
    %v951 = vsel %vm950, %v946, %v930
    %v952 = vsel %vm950, %v947, %v932
    %v953 = vsel %vm950, %v948, %v934
    %v954 = vsel %vm950, %v949, %v936
    %v955 = vld [vmem:[%s6] sm:$0x1]
    %v957 = vperm.slane %v955, 0
    %v959 = vadd.f32 %v951, %v957
    %v960 = vadd.f32 %v952, %v957
    %v961 = vadd.f32 %v953, %v957
    %v962 = vadd.f32 %v954, %v957
    %963 = vst.msk [vmem:[#allocation5] sm:$0xff] %vm193, %v959
    %964 = vst.msk [vmem:[#allocation5 + $0x8] sm:$0xff] %vm193, %v960
    %965 = vst.msk [vmem:[#allocation5 + $0x10] sm:$0xff] %vm193, %v961
    %966 = vst.msk [vmem:[#allocation5 + $0x18] sm:$0xff] %vm193, %v962
    // Predicated region
    $region34: #{tpu_custom_call.1} parent=1 // pred_check
      _
    $region35: #{tpu_custom_call.1} parent=1 // pred_check_branch
      %968 = sbr.rel (0) target = $region37
    $region36: #{tpu_custom_call.1} parent=1 // pred_region
      %970 = vsyncadd [#allocation4], 0
      %s971 = sshll.u32 [#allocation5], 4
      %s972 = int_to_ptr.vmem [resolvable:$true] %s971
      %s973 = sshll.u32 %s7, 4
      %s974 = int_to_ptr.hbm [resolvable:$true] %s973
      %979 = dma.vmem_to_hbm [thread:$0]  %s972, 512, %s974, [#allocation4], 128, 128, 8
    $region37: #{tpu_custom_call.1} parent=1 // pred_fallthru
      _
    // Predicated region
    $region38: #{tpu_custom_call.1} parent=1 // pred_check
      _
    $region39: #{tpu_custom_call.1} parent=1 // pred_check_branch
      %981 = sbr.rel (0) target = $region41
    $region40: #{tpu_custom_call.1} parent=1 // pred_region
      %983 = dma.done [#allocation4], 512
    $region41: #{tpu_custom_call.1} parent=1 // pred_fallthru
      _
    %984 = vsyncpa [#allocation3], 1
    %985 = vsyncpa [#allocation4], 1

</llo_original>
